<compile_context>
chip_gen: v5e
topology: v5e:2x2
jax: 0.10.0
libtpu: 0.0.40
codegen_flags: <defaults>
</compile_context>

<pallas_src>
import functools

import jax
import jax.numpy as jnp
import numpy as np
from jax import lax
from jax.experimental import pallas as pl
from jax.experimental.pallas import tpu as pltpu

# Large finite negative: exp(mask - rowmax) underflows to exactly 0, matches
# the -inf additive mask but never produces 0/0 NaN for fully-masked rows.
_MASK_VALUE = -0.7 * float(np.finfo(np.float32).max)


def _pick_tile(dim: int, target: int) -> int:
    """Largest clean tile: full dim if small / non-divisible, else `target`."""
    if dim <= target:
        return dim
    return target if dim % target == 0 else dim


# ---------------------------------------------------------------------------
# Generic tiled linear kernel:  y = x @ w + b   (w stored (in, out))
# ---------------------------------------------------------------------------
def _linear_kernel(x_ref, w_ref, b_ref, o_ref, acc_ref):
    @pl.when(pl.program_id(2) == 0)
    def _():
        acc_ref[...] = jnp.zeros_like(acc_ref)

    # Operands stay in their input dtype (bf16 stays bf16); accumulate in f32.
    acc_ref[...] += jnp.dot(x_ref[...], w_ref[...],
                            preferred_element_type=jnp.float32)

    @pl.when(pl.program_id(2) == pl.num_programs(2) - 1)
    def _():
        o_ref[...] = (acc_ref[...] + b_ref[...].astype(jnp.float32)
                      ).astype(o_ref.dtype)


def _linear(x2d, w_t, b, *, tm=256, tn=256, tk=512):
    M, K = x2d.shape
    Kw, N = w_t.shape
    assert Kw == K and b.shape == (1, N)
    tm, tn, tk = _pick_tile(M, tm), _pick_tile(N, tn), _pick_tile(K, tk)
    return pl.pallas_call(
        _linear_kernel,
        out_shape=jax.ShapeDtypeStruct((M, N), x2d.dtype),
        grid_spec=pltpu.PrefetchScalarGridSpec(
            num_scalar_prefetch=0,
            grid=(M // tm, N // tn, K // tk),
            in_specs=[
                pl.BlockSpec((tm, tk), lambda i, j, k: (i, k)),   # x
                pl.BlockSpec((tk, tn), lambda i, j, k: (k, j)),   # w (in,out)
                pl.BlockSpec((1, tn), lambda i, j, k: (0, j)),    # bias
            ],
            out_specs=pl.BlockSpec((tm, tn), lambda i, j, k: (i, j)),
            scratch_shapes=[pltpu.VMEM((tm, tn), jnp.float32)],
        ),
        compiler_params=pltpu.CompilerParams(
            dimension_semantics=("parallel", "parallel", "arbitrary"),
            vmem_limit_bytes=64 * 1024 * 1024,   # explicit budget (>= 32MiB default)
        ),
    )(x2d, w_t, b)


# ---------------------------------------------------------------------------
# Flash-attention kernel (online softmax).  q/k already carry the hd^-0.25
# scale (folded into the projection weights).
# ---------------------------------------------------------------------------
def _flash_kernel(q_ref, k_ref, v_ref, o_ref, m_scr, l_scr, acc_scr,
                  *, block_q, block_k, causal):
    qi = pl.program_id(2)
    ki = pl.program_id(3)

    @pl.when(ki == 0)
    def _():
        m_scr[...] = jnp.full_like(m_scr, -jnp.inf)
        l_scr[...] = jnp.zeros_like(l_scr)
        acc_scr[...] = jnp.zeros_like(acc_scr)

    def _step():
        q = q_ref[0, 0]                          # (tq, hd)
        k = k_ref[0, 0]                          # (tk, hd)
        # Contract last axes of both operands -> (tq, tk); no K transpose.
        s = lax.dot_general(q, k, (((1,), (1,)), ((), ())),
                            preferred_element_type=jnp.float32)
        if causal:
            rows = qi * block_q + lax.broadcasted_iota(jnp.int32, s.shape, 0)
            cols = ki * block_k + lax.broadcasted_iota(jnp.int32, s.shape, 1)
            s = jnp.where(cols <= rows, s, _MASK_VALUE)

        m_prev = m_scr[...]                      # (tq, 1)
        m_new = jnp.maximum(m_prev, jnp.max(s, axis=-1, keepdims=True))
        alpha = jnp.exp(m_prev - m_new)
        p = jnp.exp(s - m_new)                   # f32 (tq, tk)
        l_scr[...] = alpha * l_scr[...] + jnp.sum(p, axis=-1, keepdims=True)
        acc_scr[...] = alpha * acc_scr[...] + jnp.dot(
            p.astype(v_ref.dtype), v_ref[0, 0],
            preferred_element_type=jnp.float32)
        m_scr[...] = m_new

    if causal:
        # Skip kv tiles that lie entirely above the diagonal for this q tile.
        pl.when(ki * block_k < (qi + 1) * block_q)(_step)
    else:
        _step()

    @pl.when(ki == pl.num_programs(3) - 1)
    def _():
        # Normalization deferred to finalize (once per q tile).  Exact
        # reciprocal kept so the correctness check stays tight; approx=True
        # is a valid EUP-only alternative.
        inv = pl.reciprocal(l_scr[...], approx=False)
        o_ref[0, 0] = (acc_scr[...] * inv).astype(o_ref.dtype)


# ---------------------------------------------------------------------------
# Wrapper
# ---------------------------------------------------------------------------
def multi_head_attention(x, params, n_head, *, causal=True,
                         block_q=128, block_k=128):
    """Forward pass of Whisper's MultiHeadAttention (self-attention path).

    x: (B, T, D).  params: torch.nn.Linear-layout weights (out, in), biases
    (1, D).  causal=True reproduces the module's registered triu(-inf) mask;
    causal=False reproduces mask=None.
    """
    # TODO(synk): cross-attention (xa) and kv_cache paths are not implemented.
    B, T, D = x.shape
    assert D % n_head == 0
    hd = D // n_head
    scale = float(hd) ** (-0.25)
    dtype = x.dtype

    # ---- one-time wrapper weight prep (O(D^2)): fuse QKV, fold scale, -----
    # ---- transpose to (in, out) so kernels never transpose weights. -------
    w_qkv = jnp.concatenate([params["wq"] * scale,
                             params["wk"] * scale,
                             params["wv"]], axis=0)              # (3D, D)
    w_qkv = jnp.transpose(w_qkv).astype(dtype)                   # (D, 3D)
    b_qkv = jnp.concatenate([params["bq"][0] * scale,
                             jnp.zeros((D,), params["bq"].dtype),
                             params["bv"][0]])[None, :].astype(dtype)
    w_out = jnp.transpose(params["wo"]).astype(dtype)            # (D, D)
    b_out = params["bo"].astype(dtype)

    # ---- fused QKV projection: one (BT,D) x (D,3D) tiled matmul -----------
    qkv = _linear(x.reshape(B * T, D), w_qkv, b_qkv)             # (BT, 3D)
    qkv = qkv.reshape(B, T, 3, n_head, hd)
    # One-time relayout to (B, H, T, hd): attention blocks become lane-dense
    # 2-D tiles with hd as the full minor dim (no per-head slicing in-kernel).
    q = jnp.transpose(qkv[:, :, 0], (0, 2, 1, 3))
    k = jnp.transpose(qkv[:, :, 1], (0, 2, 1, 3))
    v = jnp.transpose(qkv[:, :, 2], (0, 2, 1, 3))

    tq, tk = _pick_tile(T, block_q), _pick_tile(T, block_k)
    attn = pl.pallas_call(
        functools.partial(_flash_kernel, block_q=tq, block_k=tk,
                          causal=causal),
        out_shape=jax.ShapeDtypeStruct((B, n_head, T, hd), dtype),
        grid_spec=pltpu.PrefetchScalarGridSpec(
            num_scalar_prefetch=0,
            grid=(B, n_head, T // tq, T // tk),
            in_specs=[
                pl.BlockSpec((1, 1, tq, hd), lambda b, h, i, j: (b, h, i, 0)),
                pl.BlockSpec((1, 1, tk, hd), lambda b, h, i, j: (b, h, j, 0)),
                pl.BlockSpec((1, 1, tk, hd), lambda b, h, i, j: (b, h, j, 0)),
            ],
            out_specs=pl.BlockSpec((1, 1, tq, hd),
                                   lambda b, h, i, j: (b, h, i, 0)),
            scratch_shapes=[
                pltpu.VMEM((tq, 1), jnp.float32),    # running max  m
                pltpu.VMEM((tq, 1), jnp.float32),    # running sum  l
                pltpu.VMEM((tq, hd), jnp.float32),   # un-normalized acc
            ],
        ),
        compiler_params=pltpu.CompilerParams(
            # B / head / q-tile all parallel -> megacore sharding even at B=1;
            # kv (reduction) axis last and "arbitrary".
            dimension_semantics=("parallel", "parallel", "parallel",
                                 "arbitrary"),
            vmem_limit_bytes=64 * 1024 * 1024,
        ),
    )(q, k, v)

    # ---- back to (BT, D) and output projection -----------------------------
    attn = jnp.transpose(attn, (0, 2, 1, 3)).reshape(B * T, D)
    out = _linear(attn, w_out, b_out)
    return out.reshape(B, T, D)


# ---------------------------------------------------------------------------
# Pure-JAX reference mirroring the PyTorch module exactly
# ---------------------------------------------------------------------------
def _reference(x, params, mask, n_head):
    B, T, D = x.shape
    hd = D // n_head
    scale = hd ** (-0.25)
    q = x @ params["wq"].T + params["bq"][0]
    k = x @ params["wk"].T
    v = x @ params["wv"].T + params["bv"][0]
    q = q.reshape(B, T, n_head, hd).transpose(0, 2, 1, 3) * scale   # (B,H,T,hd)
    k = k.reshape(B, T, n_head, hd).transpose(0, 2, 3, 1) * scale   # (B,H,hd,T)
    v = v.reshape(B, T, n_head, hd).transpose(0, 2, 1, 3)           # (B,H,T,hd)
    qk = q @ k
    if mask is not None:
        qk = qk + mask[:T, :T]
    w = jax.nn.softmax(qk.astype(jnp.float32), axis=-1).astype(q.dtype)
    av = (w @ v).transpose(0, 2, 1, 3).reshape(B, T, D)
    return av @ params["wo"].T + params["bo"][0]


if __name__ == "__main__":
    B, T, D, H = 2, 8, 32, 4

    key = jax.random.PRNGKey(0)
    keys = jax.random.split(key, 8)
    s = 0.1
    params = {
        "wq": jax.random.normal(keys[0], (D, D), jnp.float32) * s,
        "bq": jax.random.normal(keys[1], (1, D), jnp.float32) * s,
        "wk": jax.random.normal(keys[2], (D, D), jnp.float32) * s,
        "wv": jax.random.normal(keys[3], (D, D), jnp.float32) * s,
        "bv": jax.random.normal(keys[4], (1, D), jnp.float32) * s,
        "wo": jax.random.normal(keys[5], (D, D), jnp.float32) * s,
        "bo": jax.random.normal(keys[6], (1, D), jnp.float32) * s,
    }
    x = jax.random.normal(keys[7], (B, T, D), jnp.float32)

    out = multi_head_attention(x, params, H, causal=True)
    out = jax.block_until_ready(out)

    # reference uses the same causal additive mask as Whisper's buffer
    mask = jnp.triu(jnp.full((T, T), -jnp.inf, dtype=jnp.float32), k=1)
    ref = _reference(x, params, mask, H)
    np.testing.assert_allclose(np.asarray(out), np.asarray(ref),
                               rtol=1e-4, atol=1e-5)
    print("KERNEL_OK")
</pallas_src>

<mosaic_0001>
module attributes {stable_mosaic.version = 11 : i64} {
  func.func @_linear_kernel(%arg0: i32, %arg1: i32, %arg2: i32, %arg3: memref<16x32xf32, #tpu.memory_space<vmem>>, %arg4: memref<32x96xf32, #tpu.memory_space<vmem>>, %arg5: memref<1x96xf32, #tpu.memory_space<vmem>>, %arg6: memref<16x96xf32, #tpu.memory_space<vmem>>, %arg7: memref<16x96xf32, #tpu.memory_space<vmem>>) attributes {dimension_semantics = [#tpu.dimension_semantics<parallel>, #tpu.dimension_semantics<parallel>, #tpu.dimension_semantics<arbitrary>], iteration_bounds = array<i64: 1, 1, 1>, scalar_prefetch = 0 : i64, scratch_operands = 1 : i64, tpu.core_type = #tpu.core_type<tc>, window_params = [{transform_indices = @transform_0, window_bounds = array<i64: 16, 32>}, {transform_indices = @transform_1, window_bounds = array<i64: 32, 96>}, {transform_indices = @transform_2, window_bounds = array<i64: 1, 96>}, {transform_indices = @transform_3, window_bounds = array<i64: 16, 96>}]} {
    %c0_i32 = arith.constant 0 : i32
    %0 = arith.cmpi eq, %arg2, %c0_i32 : i32
    %1 = arith.extui %0 : i1 to i32
    %c0_i32_0 = arith.constant 0 : i32
    %2 = arith.cmpi ne, %1, %c0_i32_0 : i32
    scf.if %2 {
      %cst_10 = arith.constant 0.000000e+00 : f32
      %12 = vector.broadcast %cst_10 : f32 to vector<16x96xf32>
      %c0_11 = arith.constant 0 : index
      %c0_12 = arith.constant 0 : index
      %13 = vector.load %arg7[%c0_11, %c0_12] : memref<16x96xf32, #tpu.memory_space<vmem>>, vector<16x96xf32>
      tpu.vector_store %arg7[%c0_11, %c0_12], %12 {strides = array<i32>} : memref<16x96xf32, #tpu.memory_space<vmem>>, vector<16x96xf32>,
    } else {
    }
    %c0 = arith.constant 0 : index
    %c0_1 = arith.constant 0 : index
    %3 = vector.load %arg7[%c0, %c0_1] : memref<16x96xf32, #tpu.memory_space<vmem>>, vector<16x96xf32>
    %c0_2 = arith.constant 0 : index
    %c0_3 = arith.constant 0 : index
    %4 = vector.load %arg3[%c0_2, %c0_3] : memref<16x32xf32, #tpu.memory_space<vmem>>, vector<16x32xf32>
    %c0_4 = arith.constant 0 : index
    %c0_5 = arith.constant 0 : index
    %5 = vector.load %arg4[%c0_4, %c0_5] : memref<32x96xf32, #tpu.memory_space<vmem>>, vector<32x96xf32>
    %cst = arith.constant dense<0.000000e+00> : vector<16x96xf32>
    %6 = tpu.matmul %4, %5, %cst {dimension_numbers = #tpu.dot_dimension_numbers<[1], [0], [0], [1], [0, 0, 1, 1], [], []>} : vector<16x32xf32>, vector<32x96xf32>, vector<16x96xf32> -> vector<16x96xf32>
    %7 = arith.addf %3, %6 : vector<16x96xf32>
    %c0_6 = arith.constant 0 : index
    %c0_7 = arith.constant 0 : index
    %8 = vector.load %arg7[%c0_6, %c0_7] : memref<16x96xf32, #tpu.memory_space<vmem>>, vector<16x96xf32>
    tpu.vector_store %arg7[%c0_6, %c0_7], %7 {strides = array<i32>} : memref<16x96xf32, #tpu.memory_space<vmem>>, vector<16x96xf32>,
    %c0_i32_8 = arith.constant 0 : i32
    %9 = arith.cmpi eq, %arg2, %c0_i32_8 : i32
    %10 = arith.extui %9 : i1 to i32
    %c0_i32_9 = arith.constant 0 : i32
    %11 = arith.cmpi ne, %10, %c0_i32_9 : i32
    scf.if %11 {
      %c0_10 = arith.constant 0 : index
      %c0_11 = arith.constant 0 : index
      %12 = vector.load %arg7[%c0_10, %c0_11] : memref<16x96xf32, #tpu.memory_space<vmem>>, vector<16x96xf32>
      %c0_12 = arith.constant 0 : index
      %c0_13 = arith.constant 0 : index
      %13 = vector.load %arg5[%c0_12, %c0_13] : memref<1x96xf32, #tpu.memory_space<vmem>>, vector<1x96xf32>
      %14 = vector.broadcast %13 : vector<1x96xf32> to vector<16x96xf32>
      %15 = arith.addf %12, %14 : vector<16x96xf32>
      %c0_14 = arith.constant 0 : index
      %c0_15 = arith.constant 0 : index
      %16 = vector.load %arg6[%c0_14, %c0_15] : memref<16x96xf32, #tpu.memory_space<vmem>>, vector<16x96xf32>
      tpu.vector_store %arg6[%c0_14, %c0_15], %15 {strides = array<i32>} : memref<16x96xf32, #tpu.memory_space<vmem>>, vector<16x96xf32>,
    } else {
    }
    return
  }
  func.func @transform_0(%arg0: i32, %arg1: i32, %arg2: i32) -> (i32, i32) {
    %c0_i32 = arith.constant 0 : i32
    return %arg0, %arg2 : i32, i32
  }
  func.func @transform_1(%arg0: i32, %arg1: i32, %arg2: i32) -> (i32, i32) {
    %c0_i32 = arith.constant 0 : i32
    return %arg2, %arg1 : i32, i32
  }
  func.func @transform_2(%arg0: i32, %arg1: i32, %arg2: i32) -> (i32, i32) {
    %c0_i32 = arith.constant 0 : i32
    %c0_i32_0 = arith.constant 0 : i32
    return %c0_i32, %arg1 : i32, i32
  }
  func.func @transform_3(%arg0: i32, %arg1: i32, %arg2: i32) -> (i32, i32) {
    %c0_i32 = arith.constant 0 : i32
    return %arg0, %arg1 : i32, i32
  }
}

</mosaic_0001>

<llo_original>
// kernel: tpu_custom_call.1
$region0: #{tpu_custom_call.1}
  #allocation0 [shape = 'u32[]', space=smem, size = 0x4, offset = 0x4, fixed_abs, tag = 'smem constant byte address 0x4 - core index']
  #allocation1 [shape = 'u32[72,128]{1,0:T(1,128)}', space=vmem, size = 0x9000, scoped, tag = 'internal scratch']
  #allocation2 [shape = 'f32[16,96]{1,0:T(8,128)}', space=vmem, size = 0x2000, scoped, tag = 'scratch operand']
  %s0 = inlined_call_operand.hbm [shape: f32[16,32], index: 0, kind: input, shape index: {}]
  %s1 = inlined_call_operand.hbm [shape: f32[32,96], index: 1, kind: input, shape index: {}]
  %s2 = inlined_call_operand.vmem [shape: f32[1,96], index: 2, kind: input, shape index: {}]
  %s3 = inlined_call_operand.hbm [shape: f32[16,96], index: 3, kind: output, shape index: {}]
  %s4 = sld [smem:[#allocation0]]
  $region38: #{tpu_custom_call.1} parent=0
    _
  %s6 = ssub.s32 1, %s4
  %s7 = scalar_select 0, %s6, %s4
  $region1: #{tpu_custom_call.1} parent=0
    #allocation3 [shape = 'u8[8192]{0}', space=vmem, size = 0x2000, scoped, tag = 'input window, operand 0, single buffered']
    #allocation4 [shape = 's32[1]{0}', space=sflag, size = 0x4, scoped, tag = 'scoped memory for tpu_custom_call.1']
    #allocation5 [shape = 's32[1]{0}', space=sflag, size = 0x4, scoped, tag = 'scoped memory for tpu_custom_call.1']
    #allocation6 [shape = 'u8[16384]{0}', space=vmem, size = 0x4000, scoped, tag = 'input window, operand 1, single buffered']
    #allocation7 [shape = 's32[1]{0}', space=sflag, size = 0x4, scoped, tag = 'scoped memory for tpu_custom_call.1']
    #allocation8 [shape = 'u8[8192]{0}', space=vmem, size = 0x2000, scoped, tag = 'output window, operand 0, single buffered']
    %8 = vsyncpa [#allocation4], 0
    %9 = vsyncpa [#allocation7], 0
    %10 = vsyncpa [#allocation5], 0
    // Predicated region
    $region2: #{tpu_custom_call.1} parent=1 // pred_check
      _
    $region3: #{tpu_custom_call.1} parent=1 // pred_check_branch
      %12 = sbr.rel (0) target = $region5
    $region4: #{tpu_custom_call.1} parent=1 // pred_region
      %14 = vsyncadd [#allocation4], 0
      %s15 = sshll.u32 %s0, 4
      %s16 = int_to_ptr.hbm [resolvable:$true] %s15
      %s17 = sshll.u32 [#allocation3], 4
      %s18 = int_to_ptr.vmem [resolvable:$true] %s17
      %23 = dma.hbm_to_vmem [thread:$0]  %s16, 256, %s18, [#allocation4], 128, 128, 8
    $region5: #{tpu_custom_call.1} parent=1 // pred_fallthru
      _
    // Predicated region
    $region6: #{tpu_custom_call.1} parent=1 // pred_check
      _
    $region7: #{tpu_custom_call.1} parent=1 // pred_check_branch
      %25 = sbr.rel (0) target = $region9
    $region8: #{tpu_custom_call.1} parent=1 // pred_region
      %27 = vsyncadd [#allocation7], 0
      %s28 = sshll.u32 %s1, 4
      %s29 = int_to_ptr.hbm [resolvable:$true] %s28
      %s30 = sshll.u32 [#allocation6], 4
      %s31 = int_to_ptr.vmem [resolvable:$true] %s30
      %36 = dma.hbm_to_vmem [thread:$0]  %s29, 512, %s31, [#allocation7], 128, 128, 8
    $region9: #{tpu_custom_call.1} parent=1 // pred_fallthru
      _
    // Predicated region
    $region10: #{tpu_custom_call.1} parent=1 // pred_check
      _
    $region11: #{tpu_custom_call.1} parent=1 // pred_check_branch
      %38 = sbr.rel (0) target = $region13
    $region12: #{tpu_custom_call.1} parent=1 // pred_region
      _
    $region13: #{tpu_custom_call.1} parent=1 // pred_fallthru
      _
    // Predicated region
    $region14: #{tpu_custom_call.1} parent=1 // pred_check
      _
    $region15: #{tpu_custom_call.1} parent=1 // pred_check_branch
      %40 = sbr.rel (0) target = $region17
    $region16: #{tpu_custom_call.1} parent=1 // pred_region
      %42 = dma.done [#allocation4], 256
    $region17: #{tpu_custom_call.1} parent=1 // pred_fallthru
      _
    // Predicated region
    $region18: #{tpu_custom_call.1} parent=1 // pred_check
      _
    $region19: #{tpu_custom_call.1} parent=1 // pred_check_branch
      %44 = sbr.rel (0) target = $region21
    $region20: #{tpu_custom_call.1} parent=1 // pred_region
      %46 = dma.done [#allocation7], 512
    $region21: #{tpu_custom_call.1} parent=1 // pred_fallthru
      _
    %p47 = scmp.eq.s32.totalorder 0, 0
    // Predicated region
    $region22: #{tpu_custom_call.1} parent=1 // pred_check
      %p48 = pneg %p47
    $region23: #{tpu_custom_call.1} parent=1 // pred_check_branch
      %50 = sbr.rel (%p48) target = $region25
    $region24: #{tpu_custom_call.1} parent=1 // pred_region
      %vm51 = vcmask 785408
      %52 = vst.msk [vmem:[#allocation2] sm:$0xff] %vm51, 0.0
      %53 = vst.msk [vmem:[#allocation2 + $0x8] sm:$0xff] %vm51, 0.0
    $region25: #{tpu_custom_call.1} parent=1 // pred_fallthru
      _
    %v54 = vld [vmem:[#allocation2] sm:$0xff]
    %v55 = vld [vmem:[#allocation2 + $0x8] sm:$0xff]
    %v56 = vld [vmem:[#allocation3] sm:$0xff]
    %v57 = vld [vmem:[#allocation3 + $0x8] sm:$0xff]
    %v58 = vld [vmem:[#allocation6] sm:$0xff]
    %v59 = vld [vmem:[#allocation6 + $0x8] sm:$0xff]
    %v60 = vld [vmem:[#allocation6 + $0x10] sm:$0xff]
    %v61 = vld [vmem:[#allocation6 + $0x18] sm:$0xff]
    %vm62 = vcmask 261120
    %v64 = vsel %vm62, %v56, 0
    %v67 = vsel %vm62, %v57, 0
    %69 = vmatpush.msra.mxu0 0.0
    %70 = vmatpush.msra.mxu0 0.0
    %71 = vmatpush.msra.mxu0 0.0
    %72 = vmatpush.msra.mxu0 0.0
    %73 = vmatpush.msra.mxu0 0.0
    %74 = vmatpush.msra.mxu0 0.0
    %75 = vmatpush.msra.mxu0 0.0
    %76 = vmatpush.msra.mxu0 0.0
    %77 = vmatpush.msra.mxu0 0.0
    %78 = vmatpush.msra.mxu0 0.0
    %79 = vmatpush.msra.mxu0 0.0
    %80 = vmatpush.msra.mxu0 0.0
    %81 = vmatpush.msra.mxu0 %v61
    %82 = vmatpush.msra.mxu0 %v60
    %83 = vmatpush.msra.mxu0 %v59
    %84 = vmatpush.msra.mxu0 %v58
    %85 = vmatmul.f32.gmra.mxu0 %v64
    %v86 = vpop.f32.mrf.mxu0
    %v87 = vadd.f32 0.0, %v86
    %88 = vmatmul.f32.gmra.mxu0 %v67
    %v89 = vpop.f32.mrf.mxu0
    %v90 = vadd.f32 0.0, %v89
    %91 = vdwg.mxu0
    %v92 = vadd.f32 %v54, %v87
    %v93 = vadd.f32 %v55, %v90
    %vm94 = vcmask 785408
    %95 = vst.msk [vmem:[#allocation2] sm:$0xff] %vm94, %v92
    %96 = vst.msk [vmem:[#allocation2 + $0x8] sm:$0xff] %vm94, %v93
    // Predicated region
    $region26: #{tpu_custom_call.1} parent=1 // pred_check
      %p97 = pneg %p47
    $region27: #{tpu_custom_call.1} parent=1 // pred_check_branch
      %99 = sbr.rel (%p97) target = $region29
    $region28: #{tpu_custom_call.1} parent=1 // pred_region
      %v100 = vld [vmem:[#allocation2] sm:$0xff]
      %v101 = vld [vmem:[#allocation2 + $0x8] sm:$0xff]
      %v102 = vld [vmem:[%s2] sm:$0x1]
      %v104 = vperm.slane %v102, 0
      %v106 = vadd.f32 %v100, %v104
      %v107 = vadd.f32 %v101, %v104
      %108 = vst.msk [vmem:[#allocation8] sm:$0xff] %vm94, %v106
      %109 = vst.msk [vmem:[#allocation8 + $0x8] sm:$0xff] %vm94, %v107
    $region29: #{tpu_custom_call.1} parent=1 // pred_fallthru
      _
    // Predicated region
    $region30: #{tpu_custom_call.1} parent=1 // pred_check
      _
    $region31: #{tpu_custom_call.1} parent=1 // pred_check_branch
      %111 = sbr.rel (0) target = $region33
    $region32: #{tpu_custom_call.1} parent=1 // pred_region
      %113 = vsyncadd [#allocation5], 0
      %s114 = sshll.u32 [#allocation8], 4
      %s115 = int_to_ptr.vmem [resolvable:$true] %s114
      %s116 = sshll.u32 %s3, 4
      %s117 = int_to_ptr.hbm [resolvable:$true] %s116
      %122 = dma.vmem_to_hbm [thread:$0]  %s115, 256, %s117, [#allocation5], 128, 128, 8
    $region33: #{tpu_custom_call.1} parent=1 // pred_fallthru
      _
    // Predicated region
    $region34: #{tpu_custom_call.1} parent=1 // pred_check
      _
    $region35: #{tpu_custom_call.1} parent=1 // pred_check_branch
      %124 = sbr.rel (0) target = $region37
    $region36: #{tpu_custom_call.1} parent=1 // pred_region
      %126 = dma.done [#allocation5], 256
    $region37: #{tpu_custom_call.1} parent=1 // pred_fallthru
      _
    %127 = vsyncpa [#allocation4], 1
    %128 = vsyncpa [#allocation7], 1
    %129 = vsyncpa [#allocation5], 1

</llo_original>
